<compile_context>
chip_gen: v7x
topology: tpu7x:2x2x1
jax: 0.10.0
libtpu: 0.0.40
codegen_flags: <defaults>
</compile_context>

<pallas_src>
import functools

import jax
import jax.numpy as jnp
from jax import lax
from jax.experimental import pallas as pl
from jax.experimental.pallas import tpu as pltpu


def _round_up(x: int, m: int) -> int:
    return (x + m - 1) // m * m


def _vmem_capacity_bytes() -> int:
    # Hardware-aware VMEM ceiling: 64 MiB/TC on v7x, 128 MiB on v5e/v6e.
    try:
        return int(pltpu.get_tpu_info().vmem_capacity_bytes)
    except Exception:
        return 128 * 1024 * 1024


def _vmem_limit(working_set_bytes: int, cap: int) -> int:
    # Scoped-VMEM limit: generous headroom over the tile working set, but kept
    # well below the physical per-core VMEM (compiler scratch, semaphores and
    # pipeline buffers also live there -- matters on v7x's 64 MiB).
    hi = int(0.85 * cap)
    return int(min(max(2 * working_set_bytes, 32 * 1024 * 1024), hi))


# -----------------------------------------------------------------------------
# Pass 1: fused QKV projection (bf16 MXU, bf16 outputs)
# -----------------------------------------------------------------------------
def _qkv_proj_kernel(x_ref, w_ref, q_ref, k_ref, v_ref, *, d_out, scale):
    # x_ref: (tile_p, d_in); w_ref: (d_in, 3*d_out) bf16; outputs bf16.
    x = x_ref[...].astype(w_ref.dtype)            # bf16 operands -> native MXU rate
    qkv = jnp.dot(x, w_ref[...], preferred_element_type=jnp.float32)
    # Fold the 1/sqrt(d_out) scale into q: scales a (T, d_out) tensor once
    # instead of the (T, T) score matrix.  -inf masking later is unaffected.
    q_ref[...] = (qkv[:, :d_out] * scale).astype(q_ref.dtype)
    k_ref[...] = qkv[:, d_out:2 * d_out].astype(k_ref.dtype)
    v_ref[...] = qkv[:, 2 * d_out:].astype(v_ref.dtype)
    # Note: for production d_out < 128 a fused / head-packed (lane-dense) store
    # layout would avoid the masked vst.msk path here; kept separate for
    # clarity at these head sizes.


# -----------------------------------------------------------------------------
# Pass 2: flash-style causal attention, K/V resident in VMEM per super-block
# -----------------------------------------------------------------------------
def _flash_causal_kernel(q_ref, k_ref, v_ref, o_ref, m_sc, l_sc, acc_sc,
                         *, tq, tk, kv_span, d_out):
    qi = pl.program_id(1)
    ko = pl.program_id(2)
    n_ko = pl.num_programs(2)

    @pl.when(ko == 0)
    def _init():
        m_sc[...] = jnp.full_like(m_sc, -jnp.inf)
        l_sc[...] = jnp.zeros_like(l_sc)
        acc_sc[...] = jnp.zeros_like(acc_sc)

    q = q_ref[...]                       # (tq, d_out) bf16, pre-scaled
    row0 = qi * tq                       # first query row (global)
    blk0 = ko * kv_span                  # first key column of this super-block

    # kv chunks of this super-block intersecting the causal region [0, (qi+1)*tq).
    needed = jnp.clip(row0 + tq - blk0, 0, kv_span)
    n_chunks = (needed + tk - 1) // tk
    # Chunks whose last column <= first query row never see the mask.
    n_full = jnp.clip((row0 + 1 - blk0) // tk, 0, n_chunks)

    def step(c, carry, masked):
        m_prev, l_prev, acc_prev = carry
        start = pl.multiple_of(c * tk, tk)
        k = k_ref[pl.ds(start, tk), :]                       # (tk, d_out) bf16
        v = v_ref[pl.ds(start, tk), :]
        # Contract last dims of q and k directly: no k.T materialized.
        s = lax.dot_general(q, k, (((1,), (1,)), ((), ())),
                            preferred_element_type=jnp.float32)  # (tq, tk) f32
        if masked:
            r = row0 + lax.broadcasted_iota(jnp.int32, s.shape, 0)
            cg = blk0 + start + lax.broadcasted_iota(jnp.int32, s.shape, 1)
            s = jnp.where(cg > r, -jnp.inf, s)
        m_new = jnp.maximum(m_prev, jnp.max(s, axis=-1, keepdims=True))
        alpha = jnp.exp(m_prev - m_new)
        p = jnp.exp(s - m_new)                               # unnormalized
        l_new = alpha * l_prev + jnp.sum(p, axis=-1, keepdims=True)
        acc_new = alpha * acc_prev + jnp.dot(
            p.astype(v.dtype), v, preferred_element_type=jnp.float32)
        return m_new, l_new, acc_new

    carry = (m_sc[...], l_sc[...], acc_sc[...])
    # Strictly-lower chunks: no mask work (off-diagonal chunks vastly outnumber
    # the diagonal one).
    carry = lax.fori_loop(0, n_full, functools.partial(step, masked=False), carry)
    # Chunk(s) straddling the diagonal: apply the causal mask.  NaN-safe even
    # with tk > tq: the first processed chunk of every reduction always has an
    # unmasked column per row, so m stays finite before any fully-masked rows.
    m, l, acc = lax.fori_loop(n_full, n_chunks,
                              functools.partial(step, masked=True), carry)

    @pl.when(ko < n_ko - 1)
    def _save():
        m_sc[...] = m
        l_sc[...] = l
        acc_sc[...] = acc

    @pl.when(ko == n_ko - 1)
    def _finalize():
        # Deferred normalization on the (tq, d_out) output; exact reciprocal
        # (approx=False) keeps parity with the reference softmax at negligible cost.
        o_ref[...] = (acc * pl.reciprocal(l, approx=False)).astype(o_ref.dtype)


# -----------------------------------------------------------------------------
# Wrapper
# -----------------------------------------------------------------------------
def causal_attention(x, w_query, w_key, w_value):
    """x: (B, T, d_in); w_*: (d_out, d_in) as stored by nn.Linear (bias=False)."""
    B, T, d_in = x.shape
    d_out = w_query.shape[0]
    out_dtype = x.dtype
    cdt = jnp.bfloat16                      # MXU-native storage/operand dtype
    out_isz = jnp.dtype(out_dtype).itemsize
    x_isz = jnp.dtype(x.dtype).itemsize

    cap = _vmem_capacity_bytes()
    budget = int(0.45 * cap)                # working-set budget for tile choice

    # ---- tiling --------------------------------------------------------------
    # q tile: bf16 sublane tile is (16, 128) -> multiple of 16, capped at 128.
    tq = min(128, _round_up(T, 16))
    T_pad = _round_up(T, tq)
    # kv chunk for the in-kernel loop: 256 fills the 256-wide v6e/v7x MXU (and
    # halves per-element softmax bookkeeping); only used when it costs no extra
    # padding.  Neutral on v5e's 4x128^2 MXU.
    tk = 256 if (tq == 128 and T_pad % 256 == 0) else tq
    nt_q = T_pad // tq

    if T_pad != T:
        # Zero-pad tokens.  Padded key positions sit at indices >= T, so the
        # causal mask (col > row) removes them for every real query row.
        x = jnp.pad(x, ((0, 0), (0, T_pad - T), (0, 0)))

    # kv super-block: as much of K/V as fits the VMEM budget (normally all of
    # T_pad -> K/V DMA'd once per (batch, q-tile), third grid axis of size 1).
    def _attn_ws(span):
        return (2 * 2 * span * d_out * 2            # K, V (bf16, double-buffered)
                + 2 * tq * d_out * 2                # q (bf16, double-buffered)
                + 2 * tq * d_out * out_isz          # output (double-buffered)
                + tq * (2 + d_out) * 4              # m/l/acc scratch (f32)
                + 4 * tq * tk * 4)                  # s/p temporaries (f32)

    total_chunks = T_pad // tk
    kv_span = tk
    for div in range(1, total_chunks + 1):
        if total_chunks % div:
            continue
        span = (total_chunks // div) * tk
        if _attn_ws(span) <= budget:
            kv_span = span
            break
    n_ko = T_pad // kv_span

    # ---- pass 1: fused QKV projection ----------------------------------------
    # Fused weight (d_in, 3*d_out) in bf16: one wide matmul fills more MXU lanes
    # than three narrow d_out projections.
    w_qkv = jnp.concatenate([w_query.T, w_key.T, w_value.T], axis=1).astype(cdt)
    scale = 1.0 / (float(d_out) ** 0.5)     # keys.shape[-1] == d_out

    def _proj_ws(tile):
        return (2 * tile * d_in * x_isz             # x (double-buffered)
                + 2 * 3 * tile * d_out * 2          # q/k/v outs (bf16, dbl-buffered)
                + 2 * d_in * 3 * d_out * 2          # fused weight (dbl-buffered)
                + tile * 3 * d_out * 4)             # f32 qkv accumulator

    proj_tile = tq
    for cand in sorted({T_pad, 1024, 512, 256, 128, tq}, reverse=True):
        if cand <= T_pad and T_pad % cand == 0 and _proj_ws(cand) <= budget:
            proj_tile = cand
            break
    nt_p = T_pad // proj_tile

    q, k, v = pl.pallas_call(
        functools.partial(_qkv_proj_kernel, d_out=d_out, scale=scale),
        out_shape=(
            jax.ShapeDtypeStruct((B, T_pad, d_out), cdt),
            jax.ShapeDtypeStruct((B, T_pad, d_out), cdt),
            jax.ShapeDtypeStruct((B, T_pad, d_out), cdt),
        ),
        grid_spec=pltpu.PrefetchScalarGridSpec(
            num_scalar_prefetch=0,
            grid=(B, nt_p),
            in_specs=[
                pl.BlockSpec((pl.Squeezed(), proj_tile, d_in),
                             lambda b, t: (b, t, 0)),
                # Constant-index weight block: fetched once, stays in VMEM.
                # (pipeline_mode=pl.Buffered(1) would shave its second buffer;
                # negligible at these d_in/d_out, so left at the default.)
                pl.BlockSpec((d_in, 3 * d_out), lambda b, t: (0, 0)),
            ],
            out_specs=(
                pl.BlockSpec((pl.Squeezed(), proj_tile, d_out),
                             lambda b, t: (b, t, 0)),
                pl.BlockSpec((pl.Squeezed(), proj_tile, d_out),
                             lambda b, t: (b, t, 0)),
                pl.BlockSpec((pl.Squeezed(), proj_tile, d_out),
                             lambda b, t: (b, t, 0)),
            ),
        ),
        compiler_params=pltpu.CompilerParams(
            dimension_semantics=("parallel", "parallel"),
            vmem_limit_bytes=_vmem_limit(_proj_ws(proj_tile), cap),
        ),
    )(x, w_qkv)

    # ---- pass 2: flash-style causal attention --------------------------------
    # Clamp the kv super-block index for fully-masked blocks so no new HBM->VMEM
    # DMA is issued for them (they also do zero compute in-kernel).
    def kv_index(b, qi, ko):
        return (b, jnp.minimum(ko, ((qi + 1) * tq - 1) // kv_span), 0)

    out = pl.pallas_call(
        functools.partial(_flash_causal_kernel, tq=tq, tk=tk,
                          kv_span=kv_span, d_out=d_out),
        out_shape=jax.ShapeDtypeStruct((B, T_pad, d_out), out_dtype),
        grid_spec=pltpu.PrefetchScalarGridSpec(
            num_scalar_prefetch=0,
            grid=(B, nt_q, n_ko),
            in_specs=[
                pl.BlockSpec((pl.Squeezed(), tq, d_out),
                             lambda b, qi, ko: (b, qi, 0)),
                pl.BlockSpec((pl.Squeezed(), kv_span, d_out), kv_index),
                pl.BlockSpec((pl.Squeezed(), kv_span, d_out), kv_index),
            ],
            out_specs=pl.BlockSpec((pl.Squeezed(), tq, d_out),
                                   lambda b, qi, ko: (b, qi, 0)),
            scratch_shapes=[
                pltpu.VMEM((tq, 1), jnp.float32),       # running max m
                pltpu.VMEM((tq, 1), jnp.float32),       # running sum l
                pltpu.VMEM((tq, d_out), jnp.float32),   # output accumulator
            ],
        ),
        compiler_params=pltpu.CompilerParams(
            # batch / q-tile axes parallel (sharded across the 2 TCs on v7x);
            # the kv super-block axis is the sequential online-softmax reduction.
            dimension_semantics=("parallel", "parallel", "arbitrary"),
            vmem_limit_bytes=_vmem_limit(_attn_ws(kv_span), cap),
        ),
    )(q, k, v)

    if T_pad != T:
        out = out[:, :T, :]
    return out


# TODO(synk): nn.Dropout on the attention weights is identity in eval mode; a
# training-mode kernel would draw the mask with pltpu.prng_seed/prng_random_bits.


def _reference(x, w_query, w_key, w_value):
    """Pure-JAX f32 reference matching the PyTorch forward (eval mode)."""
    q = x @ w_query.T
    k = x @ w_key.T
    v = x @ w_value.T
    scores = jnp.einsum("btd,bsd->bts", q, k)
    T = x.shape[1]
    mask = jnp.triu(jnp.ones((T, T), dtype=bool), k=1)
    scores = jnp.where(mask[None], -jnp.inf, scores)
    attn = jax.nn.softmax(scores / (k.shape[-1] ** 0.5), axis=-1)
    return attn @ v


if __name__ == "__main__":
    key = jax.random.PRNGKey(0)

    # Case 1: small shapes matching the module example (single tile).
    B, T, d_in, d_out = 2, 8, 32, 16
    kx, kq, kk, kv_ = jax.random.split(key, 4)
    x = jax.random.normal(kx, (B, T, d_in), dtype=jnp.float32)
    w_query = jax.random.normal(kq, (d_out, d_in), dtype=jnp.float32) * 0.1
    w_key = jax.random.normal(kk, (d_out, d_in), dtype=jnp.float32) * 0.1
    w_value = jax.random.normal(kv_, (d_out, d_in), dtype=jnp.float32) * 0.1

    out = jax.block_until_ready(causal_attention(x, w_query, w_key, w_value))
    ref = _reference(x, w_query, w_key, w_value)
    assert out.shape == (B, T, d_out)
    # bf16 q/k/v operands (f32 accumulation / softmax stats) -> bf16-level tol.
    assert jnp.allclose(out, ref, atol=3e-2, rtol=3e-2), "case 1 mismatch vs reference"

    # Case 2: multi-q-tile path (token padding, tk=256 chunks, diag-only masking).
    B2, T2 = 1, 160
    kx2 = jax.random.split(key, 5)[4]
    x2 = jax.random.normal(kx2, (B2, T2, d_in), dtype=jnp.float32)
    out2 = jax.block_until_ready(causal_attention(x2, w_query, w_key, w_value))
    ref2 = _reference(x2, w_query, w_key, w_value)
    assert out2.shape == (B2, T2, d_out)
    assert jnp.allclose(out2, ref2, atol=3e-2, rtol=3e-2), "case 2 mismatch vs reference"

    print("KERNEL_OK")
</pallas_src>

<mosaic_0001>
module attributes {stable_mosaic.version = 11 : i64} {
  func.func @_qkv_proj_kernel(%arg0: i32, %arg1: i32, %arg2: memref<1x16x32xf32, #tpu.memory_space<vmem>>, %arg3: memref<32x48xbf16, #tpu.memory_space<vmem>>, %arg4: memref<1x16x16xbf16, #tpu.memory_space<vmem>>, %arg5: memref<1x16x16xbf16, #tpu.memory_space<vmem>>, %arg6: memref<1x16x16xbf16, #tpu.memory_space<vmem>>) attributes {dimension_semantics = [#tpu.dimension_semantics<parallel>, #tpu.dimension_semantics<parallel>], iteration_bounds = array<i64: 2, 1>, scalar_prefetch = 0 : i64, scratch_operands = 0 : i64, tpu.core_type = #tpu.core_type<tc>, window_params = [{transform_indices = @transform_0, window_bounds = array<i64: 1, 16, 32>}, {pipeline_mode = #tpu.pipeline_mode<synchronous>, transform_indices = @transform_1, window_bounds = array<i64: 32, 48>}, {transform_indices = @transform_2, window_bounds = array<i64: 1, 16, 16>}, {transform_indices = @transform_3, window_bounds = array<i64: 1, 16, 16>}, {transform_indices = @transform_4, window_bounds = array<i64: 1, 16, 16>}]} {
    %c0 = arith.constant 0 : index
    %c0_0 = arith.constant 0 : index
    %c0_1 = arith.constant 0 : index
    %0 = vector.load %arg2[%c0, %c0_0, %c0_1] : memref<1x16x32xf32, #tpu.memory_space<vmem>>, vector<1x16x32xf32>
    %1 = vector.shape_cast %0 : vector<1x16x32xf32> to vector<16x32xf32>
    %2 = arith.truncf %1 : vector<16x32xf32> to vector<16x32xbf16>
    %c0_2 = arith.constant 0 : index
    %c0_3 = arith.constant 0 : index
    %3 = vector.load %arg3[%c0_2, %c0_3] : memref<32x48xbf16, #tpu.memory_space<vmem>>, vector<32x48xbf16>
    %cst = arith.constant dense<0.000000e+00> : vector<16x48xf32>
    %4 = tpu.matmul %2, %3, %cst {dimension_numbers = #tpu.dot_dimension_numbers<[1], [0], [0], [1], [0, 0, 1, 1], [], []>} : vector<16x32xbf16>, vector<32x48xbf16>, vector<16x48xf32> -> vector<16x48xf32>
    %5 = vector.extract_strided_slice %4 {offsets = [0, 0], sizes = [16, 16], strides = [1, 1]} : vector<16x48xf32> to vector<16x16xf32>
    %cst_4 = arith.constant 2.500000e-01 : f32
    %6 = vector.broadcast %cst_4 : f32 to vector<16x16xf32>
    %7 = arith.mulf %5, %6 : vector<16x16xf32>
    %8 = arith.truncf %7 : vector<16x16xf32> to vector<16x16xbf16>
    %c0_5 = arith.constant 0 : index
    %c0_6 = arith.constant 0 : index
    %c0_7 = arith.constant 0 : index
    %9 = vector.load %arg4[%c0_5, %c0_6, %c0_7] : memref<1x16x16xbf16, #tpu.memory_space<vmem>>, vector<1x16x16xbf16>
    %10 = vector.shape_cast %9 : vector<1x16x16xbf16> to vector<16x16xbf16>
    %11 = vector.shape_cast %8 : vector<16x16xbf16> to vector<1x16x16xbf16>
    tpu.vector_store %arg4[%c0_5, %c0_6, %c0_7], %11 {strides = array<i32>} : memref<1x16x16xbf16, #tpu.memory_space<vmem>>, vector<1x16x16xbf16>,
    %12 = vector.extract_strided_slice %4 {offsets = [0, 16], sizes = [16, 16], strides = [1, 1]} : vector<16x48xf32> to vector<16x16xf32>
    %13 = arith.truncf %12 : vector<16x16xf32> to vector<16x16xbf16>
    %c0_8 = arith.constant 0 : index
    %c0_9 = arith.constant 0 : index
    %c0_10 = arith.constant 0 : index
    %14 = vector.load %arg5[%c0_8, %c0_9, %c0_10] : memref<1x16x16xbf16, #tpu.memory_space<vmem>>, vector<1x16x16xbf16>
    %15 = vector.shape_cast %14 : vector<1x16x16xbf16> to vector<16x16xbf16>
    %16 = vector.shape_cast %13 : vector<16x16xbf16> to vector<1x16x16xbf16>
    tpu.vector_store %arg5[%c0_8, %c0_9, %c0_10], %16 {strides = array<i32>} : memref<1x16x16xbf16, #tpu.memory_space<vmem>>, vector<1x16x16xbf16>,
    %17 = vector.extract_strided_slice %4 {offsets = [0, 32], sizes = [16, 16], strides = [1, 1]} : vector<16x48xf32> to vector<16x16xf32>
    %18 = arith.truncf %17 : vector<16x16xf32> to vector<16x16xbf16>
    %c0_11 = arith.constant 0 : index
    %c0_12 = arith.constant 0 : index
    %c0_13 = arith.constant 0 : index
    %19 = vector.load %arg6[%c0_11, %c0_12, %c0_13] : memref<1x16x16xbf16, #tpu.memory_space<vmem>>, vector<1x16x16xbf16>
    %20 = vector.shape_cast %19 : vector<1x16x16xbf16> to vector<16x16xbf16>
    %21 = vector.shape_cast %18 : vector<16x16xbf16> to vector<1x16x16xbf16>
    tpu.vector_store %arg6[%c0_11, %c0_12, %c0_13], %21 {strides = array<i32>} : memref<1x16x16xbf16, #tpu.memory_space<vmem>>, vector<1x16x16xbf16>,
    return
  }
  func.func @transform_0(%arg0: i32, %arg1: i32) -> (i32, i32, i32) {
    %c0_i32 = arith.constant 0 : i32
    %c0_i32_0 = arith.constant 0 : i32
    return %arg0, %arg1, %c0_i32 : i32, i32, i32
  }
  func.func @transform_1(%arg0: i32, %arg1: i32) -> (i32, i32) {
    %c0_i32 = arith.constant 0 : i32
    %c0_i32_0 = arith.constant 0 : i32
    %c0_i32_1 = arith.constant 0 : i32
    return %c0_i32, %c0_i32_0 : i32, i32
  }
  func.func @transform_2(%arg0: i32, %arg1: i32) -> (i32, i32, i32) {
    %c0_i32 = arith.constant 0 : i32
    %c0_i32_0 = arith.constant 0 : i32
    return %arg0, %arg1, %c0_i32 : i32, i32, i32
  }
  func.func @transform_3(%arg0: i32, %arg1: i32) -> (i32, i32, i32) {
    %c0_i32 = arith.constant 0 : i32
    %c0_i32_0 = arith.constant 0 : i32
    return %arg0, %arg1, %c0_i32 : i32, i32, i32
  }
  func.func @transform_4(%arg0: i32, %arg1: i32) -> (i32, i32, i32) {
    %c0_i32 = arith.constant 0 : i32
    %c0_i32_0 = arith.constant 0 : i32
    return %arg0, %arg1, %c0_i32 : i32, i32, i32
  }
}

</mosaic_0001>

<llo_original>
// kernel: tpu_custom_call.1
$region0: #{tpu_custom_call.1}
  #allocation0 [shape = 'u32[]', space=smem, size = 0x4, offset = 0x4, fixed_abs, tag = 'smem constant byte address 0x4 - core index']
  #allocation1 [shape = 'u32[144,128]{1,0:T(1,128)}', space=vmem, size = 0x12000, scoped, tag = 'internal scratch']
  %s0 = inlined_call_operand.hbm [shape: f32[2,16,32], index: 0, kind: input, shape index: {}]
  %s1 = inlined_call_operand.hbm [shape: bf16[32,48], index: 1, kind: input, shape index: {}]
  %s2 = inlined_call_operand.hbm [shape: bf16[2,16,16], index: 2, kind: output, shape index: {0}]
  %s3 = inlined_call_operand.hbm [shape: bf16[2,16,16], index: 3, kind: output, shape index: {1}]
  %s4 = inlined_call_operand.hbm [shape: bf16[2,16,16], index: 4, kind: output, shape index: {2}]
  %5 = xla_tuple %s2, %s3, %s4
  %s6 = sld [smem:[#allocation0]]
  $region65: #{tpu_custom_call.1} parent=0
    _
  %s8 = ssub.s32 1, %s6
  %s9 = scalar_select 0, %s8, %s6
  $region1: #{tpu_custom_call.1} parent=0
    #allocation2 [shape = 'u8[16384]{0}', space=vmem, size = 0x4000, scoped, tag = 'input window, operand 0']
    #allocation3 [shape = 's32[2]{0}', space=sflag, size = 0x8, scoped, tag = 'scoped memory for tpu_custom_call.1']
    #allocation4 [shape = 's32[2]{0}', space=sflag, size = 0x8, scoped, tag = 'scoped memory for tpu_custom_call.1']
    #allocation5 [shape = 'u8[8192]{0}', space=vmem, size = 0x2000, scoped, tag = 'input window, operand 1, single buffered']
    #allocation6 [shape = 's32[1]{0}', space=sflag, size = 0x4, scoped, tag = 'scoped memory for tpu_custom_call.1']
    #allocation7 [shape = 'u8[8192]{0}', space=vmem, size = 0x2000, scoped, tag = 'output window, operand 0']
    #allocation8 [shape = 'u8[8192]{0}', space=vmem, size = 0x2000, scoped, tag = 'output window, operand 1']
    #allocation9 [shape = 's32[2]{0}', space=sflag, size = 0x8, scoped, tag = 'scoped memory for tpu_custom_call.1']
    #allocation10 [shape = 'u8[8192]{0}', space=vmem, size = 0x2000, scoped, tag = 'output window, operand 2']
    %10 = vsyncpa [#allocation3], 0
    %s11 = scalar_lea.sflag [#allocation3], 1
    %12 = vsyncpa %s11, 0
    %13 = vsyncpa [#allocation6], 0
    %14 = vsyncpa [#allocation4], 0
    %s15 = scalar_lea.sflag [#allocation4], 1
    %16 = vsyncpa %s15, 0
    %17 = vsyncpa [#allocation9], 0
    %s18 = scalar_lea.sflag [#allocation9], 1
    %19 = vsyncpa %s18, 0
    loop: start=0, step=1, limit=4
    $region2: #{tpu_custom_call.1} parent=1 // loop_pre_header
      _
    $region3: #{tpu_custom_call.1} parent=1 // loop_header
      %s21 = sphi 0, %s25
      %p22 = scmp.ge.s32.totalorder %s21, 4
      %s28 = sphi 0, %s40
      %s29 = sphi 0, %s36
      %s30 = sphi 0, %s28
      %s31 = sphi 0, %s29
      %s32 = sphi 0, %s30
      %s33 = sphi 0, %s31
      %s45 = sphi 0, %s47
      %s48 = sphi 0, %s45
      %s49 = sphi 0, %s48
      %s65 = sphi 0, %s49
      %s69 = sphi 0, %s69
      %s71 = sphi 0, %s69
      %s72 = sphi 0, %s71
      %s86 = sphi 0, %s72
      %s94 = sphi 0, %s96
      %s97 = sphi 0, %s94
      %s98 = sphi 0, %s97
      %s114 = sphi 0, %s98
      %s122 = sphi 0, %s124
      %s125 = sphi 0, %s122
      %s126 = sphi 0, %s125
      %s142 = sphi 0, %s126
      %s150 = sphi 0, %s152
      %s153 = sphi 0, %s150
      %s154 = sphi 0, %s153
      %s170 = sphi 0, %s154
    $region4: #{tpu_custom_call.1} parent=1 // loop_header_branch
      %24 = sbr.rel (%p22) target = $region8
    $region5: #{tpu_custom_call.1} parent=1 // loop_body
      %s26 = ssub.s32 %s21, 1
      %s27 = ssub.s32 %s21, 2
      %s34 = sadd.s32 1, %s29
      %p35 = scmp.ge.s32.totalorder %s34, 1
      %s36 = scalar_select %p35, 0, %s34
      %s37 = sadd.s32 1, %s28
      %s38 = scalar_select %p35, %s37, %s28
      %p39 = scmp.ge.s32.totalorder %s38, 2
      %s40 = scalar_select %p39, 0, %s38
      %s41 = ssub.s32 %s28, %s40
      %s42 = ssub.s32 %s29, %s36
      %s43 = sor.u32 %s41, %s42
      %p44 = scmp.eq.s32.totalorder %s43, 0
      %s46 = sadd.s32 %s45, 1
      %s47 = scalar_select %p44, %s45, %s46
      %p50 = pneg %p44
      %p51 = scmp.eq.s32.totalorder %s21, 1
      %p52 = por %p50, %p51
      %p53 = scmp.ne.s32.totalorder %s45, %s48
      %p54 = scmp.eq.s32.totalorder %s21, 0
      %p55 = por %p53, %p54
      %p56 = scmp.ne.s32.totalorder %s45, %s48
      %p57 = scmp.eq.s32.totalorder %s26, 1
      %p58 = por %p56, %p57
      %p59 = scmp.ne.s32.totalorder %s48, %s49
      %p60 = scmp.eq.s32.totalorder %s26, 0
      %p61 = por %p59, %p60
      %p62 = scmp.ne.s32.totalorder %s48, %s49
      %p63 = scmp.eq.s32.totalorder %s27, 1
      %p64 = por %p62, %p63
      %p66 = scmp.ne.s32.totalorder %s49, %s65
      %p67 = scmp.eq.s32.totalorder %s27, 0
      %p68 = por %p66, %p67
      %s70 = sadd.s32 %s69, 1
      %p73 = scmp.eq.s32.totalorder %s21, 1
      %p74 = scmp.ne.s32.totalorder %s69, %s71
      %p75 = scmp.eq.s32.totalorder %s21, 0
      %p76 = por %p74, %p75
      %p77 = scmp.ne.s32.totalorder %s69, %s71
      %p78 = scmp.eq.s32.totalorder %s26, 1
      %p79 = por %p77, %p78
      %p80 = scmp.ne.s32.totalorder %s71, %s72
      %p81 = scmp.eq.s32.totalorder %s26, 0
      %p82 = por %p80, %p81
      %p83 = scmp.ne.s32.totalorder %s71, %s72
      %p84 = scmp.eq.s32.totalorder %s27, 1
      %p85 = por %p83, %p84
      %p87 = scmp.ne.s32.totalorder %s72, %s86
      %p88 = scmp.eq.s32.totalorder %s27, 0
      %p89 = por %p87, %p88
      %s90 = ssub.s32 %s28, %s40
      %s91 = ssub.s32 %s29, %s36
      %s92 = sor.u32 %s90, %s91
      %p93 = scmp.eq.s32.totalorder %s92, 0
      %s95 = sadd.s32 %s94, 1
      %s96 = scalar_select %p93, %s94, %s95
      %p99 = pneg %p93
      %p100 = scmp.eq.s32.totalorder %s21, 1
      %p101 = por %p99, %p100
      %p102 = scmp.ne.s32.totalorder %s94, %s97
      %p103 = scmp.eq.s32.totalorder %s21, 0
      %p104 = por %p102, %p103
      %p105 = scmp.ne.s32.totalorder %s94, %s97
      %p106 = scmp.eq.s32.totalorder %s26, 1
      %p107 = por %p105, %p106
      %p108 = scmp.ne.s32.totalorder %s97, %s98
      %p109 = scmp.eq.s32.totalorder %s26, 0
      %p110 = por %p108, %p109
      %p111 = scmp.ne.s32.totalorder %s97, %s98
      %p112 = scmp.eq.s32.totalorder %s27, 1
      %p113 = por %p111, %p112
      %p115 = scmp.ne.s32.totalorder %s98, %s114
      %p116 = scmp.eq.s32.totalorder %s27, 0
      %p117 = por %p115, %p116
      %s118 = ssub.s32 %s28, %s40
      %s119 = ssub.s32 %s29, %s36
      %s120 = sor.u32 %s118, %s119
      %p121 = scmp.eq.s32.totalorder %s120, 0
      %s123 = sadd.s32 %s122, 1
      %s124 = scalar_select %p121, %s122, %s123
      %p127 = pneg %p121
      %p128 = scmp.eq.s32.totalorder %s21, 1
      %p129 = por %p127, %p128
      %p130 = scmp.ne.s32.totalorder %s122, %s125
      %p131 = scmp.eq.s32.totalorder %s21, 0
      %p132 = por %p130, %p131
      %p133 = scmp.ne.s32.totalorder %s122, %s125
      %p134 = scmp.eq.s32.totalorder %s26, 1
      %p135 = por %p133, %p134
      %p136 = scmp.ne.s32.totalorder %s125, %s126
      %p137 = scmp.eq.s32.totalorder %s26, 0
      %p138 = por %p136, %p137
      %p139 = scmp.ne.s32.totalorder %s125, %s126
      %p140 = scmp.eq.s32.totalorder %s27, 1
      %p141 = por %p139, %p140
      %p143 = scmp.ne.s32.totalorder %s126, %s142
      %p144 = scmp.eq.s32.totalorder %s27, 0
      %p145 = por %p143, %p144
      %s146 = ssub.s32 %s28, %s40
      %s147 = ssub.s32 %s29, %s36
      %s148 = sor.u32 %s146, %s147
      %p149 = scmp.eq.s32.totalorder %s148, 0
      %s151 = sadd.s32 %s150, 1
      %s152 = scalar_select %p149, %s150, %s151
      %p155 = pneg %p149
      %p156 = scmp.eq.s32.totalorder %s21, 1
      %p157 = por %p155, %p156
      %p158 = scmp.ne.s32.totalorder %s150, %s153
      %p159 = scmp.eq.s32.totalorder %s21, 0
      %p160 = por %p158, %p159
      %p161 = scmp.ne.s32.totalorder %s150, %s153
      %p162 = scmp.eq.s32.totalorder %s26, 1
      %p163 = por %p161, %p162
      %p164 = scmp.ne.s32.totalorder %s153, %s154
      %p165 = scmp.eq.s32.totalorder %s26, 0
      %p166 = por %p164, %p165
      %p167 = scmp.ne.s32.totalorder %s153, %s154
      %p168 = scmp.eq.s32.totalorder %s27, 1
      %p169 = por %p167, %p168
      %p171 = scmp.ne.s32.totalorder %s154, %s170
      %p172 = scmp.eq.s32.totalorder %s27, 0
      %p173 = por %p171, %p172
      %p174 = scmp.le.s32.totalorder 1, %s21
      %p175 = scmp.lt.s32.totalorder %s21, 3
      %p176 = pnand %p174, %p175
      %p177 = pneg %p176
      // Predicated region
      $region9: #{tpu_custom_call.1} parent=5 // pred_check
        _
      $region10: #{tpu_custom_call.1} parent=5 // pred_check_branch
        %179 = sbr.rel (%p176) target = $region12
      $region11: #{tpu_custom_call.1} parent=5 // pred_region
        %s180 = ssub.s32 %s21, 1
        // Predicated region
        $region13: #{tpu_custom_call.1} parent=11 // pred_check
          %p181 = pneg %p82
        $region14: #{tpu_custom_call.1} parent=11 // pred_check_branch
          %183 = sbr.rel (%p181) target = $region16
        $region15: #{tpu_custom_call.1} parent=11 // pred_region
          %s185 = ssub.s32 256, 256
          %186 = vsyncadd [#allocation6], %s185
          %s187 = sshll.u32 [#allocation5], 4
          %s188 = int_to_ptr.vmem [resolvable:$true] %s187
          %193 = dma.hbm_to_vmem [thread:$0]  %s1, 256, %s188, [#allocation6], 64, 64, 4
        $region16: #{tpu_custom_call.1} parent=11 // pred_fallthru
          _
      $region12: #{tpu_custom_call.1} parent=5 // pred_fallthru
        _
      %p194 = scmp.lt.s32.totalorder %s21, 2
      // Predicated region
      $region17: #{tpu_custom_call.1} parent=5 // pred_check
        %p195 = pneg %p194
      $region18: #{tpu_custom_call.1} parent=5 // pred_check_branch
        %197 = sbr.rel (%p195) target = $region20
      $region19: #{tpu_custom_call.1} parent=5 // pred_region
        // Predicated region
        $region21: #{tpu_custom_call.1} parent=19 // pred_check
          %p198 = pneg %p55
        $region22: #{tpu_custom_call.1} parent=19 // pred_check_branch
          %200 = sbr.rel (%p198) target = $region24
        $region23: #{tpu_custom_call.1} parent=19 // pred_region
          %s201 = sand.u32 %s45, 1
          %s202 = scalar_lea.sflag [#allocation3], %s201
          %s203 = sand.u32 %s45, 1
          %s204 = smul.addr %s203, 16
          %s205 = scalar_lea.vmem [#allocation2], %s204
          %s206 = smul.u32 2, %s29
          %s208 = ssub.s32 256, 256
          %209 = vsyncadd %s202, %s208
          %s210 = smul.addr %s28, 2
          %s211 = sadd.s32 %s206, %s210
          %s212 = smul.addr %s211, 128
          %s213 = scalar_lea.hbm %s0, %s212
          %s214 = sshll.u32 %s205, 4
          %s215 = int_to_ptr.vmem [resolvable:$true] %s214
          %220 = dma.hbm_to_vmem [thread:$0]  %s213, 256, %s215, %s202, 128, 128, 8
        $region24: #{tpu_custom_call.1} parent=19 // pred_fallthru
          _
      $region20: #{tpu_custom_call.1} parent=5 // pred_fallthru
        _
      %p221 = scmp.le.s32.totalorder 1, %s21
      %p222 = scmp.lt.s32.totalorder %s21, 3
      %p223 = pnand %p221, %p222
      %p224 = pneg %p223
      // Predicated region
      $region25: #{tpu_custom_call.1} parent=5 // pred_check
        _
      $region26: #{tpu_custom_call.1} parent=5 // pred_check_branch
        %226 = sbr.rel (%p223) target = $region28
      $region27: #{tpu_custom_call.1} parent=5 // pred_region
        %s227 = ssub.s32 %s21, 1
        %s228 = sand.u32 %s48, 1
        %s229 = scalar_lea.sflag [#allocation3], %s228
        %s230 = sand.u32 %s48, 1
        %s231 = smul.addr %s230, 16
        %s232 = scalar_lea.vmem [#allocation2], %s231
        // Predicated region
        $region29: #{tpu_custom_call.1} parent=27 // pred_check
          %p233 = pneg %p61
        $region30: #{tpu_custom_call.1} parent=27 // pred_check_branch
          %235 = sbr.rel (%p233) target = $region32
        $region31: #{tpu_custom_call.1} parent=27 // pred_region
          %236 = dma.done %s229, 256
        $region32: #{tpu_custom_call.1} parent=27 // pred_fallthru
          _
        // Predicated region
        $region33: #{tpu_custom_call.1} parent=27 // pred_check
          %p237 = pneg %p82
        $region34: #{tpu_custom_call.1} parent=27 // pred_check_branch
          %239 = sbr.rel (%p237) target = $region36
        $region35: #{tpu_custom_call.1} parent=27 // pred_region
          %240 = dma.done [#allocation6], 256
        $region36: #{tpu_custom_call.1} parent=27 // pred_fallthru
          _
        %s241 = sand.u32 %s48, 1
        %s242 = scalar_lea.sflag [#allocation3], %s241
        %s243 = sand.u32 %s48, 1
        %s244 = smul.addr %s243, 16
        %s245 = scalar_lea.vmem [#allocation2], %s244
        %p246 = pneg %p61
        %p247 = pneg %p58
        %p248 = pneg %p82
        %p249 = pneg %p79
        %p250 = pneg %p110
        %p251 = pneg %p107
        %s252 = sand.u32 %s97, 1
        %s253 = scalar_lea.sflag [#allocation4], %s252
        %s254 = sand.u32 %s97, 1
        %s255 = smul.addr %s254, 8
        %s256 = scalar_lea.vmem [#allocation7], %s255
        %p257 = pneg %p138
        %p258 = pneg %p135
        %s259 = sand.u32 %s26, 1
        %s260 = scalar_lea.sflag [#allocation9], %s259
        %s261 = sand.u32 %s125, 1
        %s262 = smul.addr %s261, 8
        %s263 = scalar_lea.vmem [#allocation8], %s262
        %p264 = pneg %p166
        %p265 = pneg %p163
        %s266 = sand.u32 %s26, 1
        %s267 = scalar_lea.sflag [#allocation9], %s266
        %s268 = sand.u32 %s153, 1
        %s269 = smul.addr %s268, 8
        %s270 = scalar_lea.vmem [#allocation10], %s269
        %s271 = smul.u32 2, %s31
        %s272 = smul.u32 2, %s31
        %s273 = smul.u32 2, %s31
        %s274 = smul.u32 2, %s31
        %v276 = vld [vmem:[%s232] sm:$0xff]
        %v277 = vld [vmem:[%s232 + $0x8] sm:$0xff]
        %v278 = vpack.c.bf16 %v277, %v276
        %v279 = vld [vmem:[#allocation5] sm:$0xf]
        %v280 = vld [vmem:[#allocation5 + $0x4] sm:$0xf]
        %v281 = vld [vmem:[#allocation5 + $0x8] sm:$0xf]
        %v282 = vld [vmem:[#allocation5 + $0xc] sm:$0xf]
        %v287 = vunpack.c.l.b16 %v279
        %v288 = vunpack.c.l.b16 %v280
        %v289 = vunpack.c.l.b16 %v281
        %v290 = vunpack.c.l.b16 %v282
        %v291 = vpack.c.b16 %v288, %v287
        %v292 = vpack.c.b16 %v290, %v289
        %vm295 = vcmask 261120
        %v297 = vsel %vm295, %v278, 0
        %299 = vmatprep.subr.bf16.mxu0 0
        %300 = vmatpush1.bf16.msra.mxu0 %v291
        %301 = vmatprep.subr.bf16.mxu0 0
        %302 = vmatpush1.bf16.msra.mxu0 %v292
        %303 = vmatprep.subr.bf16.mxu0 0
        %304 = vmatpush1.bf16.msra.mxu0 0
        %305 = vmatprep.subr.bf16.mxu0 0
        %306 = vmatpush1.bf16.msra.mxu0 0
        %307 = vmatprep.subr.bf16.mxu0 0
        %308 = vmatpush1.bf16.msra.mxu0 0
        %309 = vmatprep.subr.bf16.mxu0 0
        %310 = vmatpush1.bf16.msra.mxu0 0
        %311 = vmatprep.subr.bf16.mxu0 0
        %312 = vmatpush1.bf16.msra.mxu0 0
        %313 = vmatprep.subr.bf16.mxu0 0
        %314 = vmatpush1.bf16.msra.mxu0 0
        %315 = vmatprep.subr.bf16.mxu0 0
        %316 = vmatpush1.bf16.msra.mxu0 0
        %317 = vmatprep.subr.bf16.mxu0 0
        %318 = vmatpush1.bf16.msra.mxu0 0
        %319 = vmatprep.subr.bf16.mxu0 0
        %320 = vmatpush1.bf16.msra.mxu0 0
        %321 = vmatprep.subr.bf16.mxu0 0
        %322 = vmatpush1.bf16.msra.mxu0 0
        %323 = vmatprep.subr.bf16.mxu0 0
        %324 = vmatpush1.bf16.msra.mxu0 0
        %325 = vmatprep.subr.bf16.mxu0 0
        %326 = vmatpush1.bf16.msra.mxu0 0
        %327 = vmatprep.subr.bf16.mxu0 0
        %328 = vmatpush1.bf16.msra.mxu0 0
        %329 = vmatprep.subr.bf16.mxu0 0
        %330 = vmatpush1.bf16.msra.mxu0 0
        %331 = vmatprep.mubr.bf16.mxu0 0
        %332 = vmatmul.mubr.bf16.gmra.mrb[0].mxu0 %v297
        %v333 = vpop.f32.mrb[0].mxu0
        %v334 = vadd.f32 0.0, %v333
        %v335 = vpop.f32.mrb[0].mxu0
        %v336 = vpop.f32.mrb[0].mxu0
        %v337 = vadd.f32 0.0, %v336
        %v338 = vpop.f32.mrb[0].mxu0
        %339 = vdwg.mxu0
        %v340 = vmul.f32 %v334, 0.25
        %v341 = vmul.f32 %v337, 0.25
        %v342 = vpack.c.bf16 %v341, %v340
        %v344 = vunpack.c.l.b16 %v342
        %v345 = vunpack.c.h.b16 %v342
        %v346 = vpack.c.b16 %v344, %v344
        %v347 = vpack.c.b16 %v345, %v345
        %vm350 = vcmask 125952
        %351 = vst.msk [vmem:[%s256] sm:$0xf] %vm350, %v346
        %352 = vst.msk [vmem:[%s256 + $0x4] sm:$0xf] %vm350, %v347
        %v353 = vpack.c.bf16 %v337, %v334
        %v355 = vunpack.c.l.b16 %v353
        %v356 = vunpack.c.h.b16 %v353
        %v357 = vpack.c.b16 %v355, %v355
        %v358 = vpack.c.b16 %v356, %v356
        %359 = vrot.lane.b32.xlu0 %v357, 112
        %v360 = vpop.permute.xlu0 %359
        %361 = vrot.lane.b32.xlu0 %v358, 112
        %v362 = vpop.permute.xlu0 %361
        %365 = vst.msk [vmem:[%s263] sm:$0xf] %vm350, %v360
        %366 = vst.msk [vmem:[%s263 + $0x4] sm:$0xf] %vm350, %v362
        %367 = vrot.lane.b32.xlu0 %v357, 96
        %v368 = vpop.permute.xlu0 %367
        %369 = vrot.lane.b32.xlu0 %v358, 96
        %v370 = vpop.permute.xlu0 %369
        %373 = vst.msk [vmem:[%s270] sm:$0xf] %vm350, %v368
        %374 = vst.msk [vmem:[%s270 + $0x4] sm:$0xf] %vm350, %v370
        %s375 = sand.u32 %s97, 1
        %s376 = scalar_lea.sflag [#allocation4], %s375
        %s377 = sand.u32 %s97, 1
        %s378 = smul.addr %s377, 8
        %s379 = scalar_lea.vmem [#allocation7], %s378
        %s380 = sand.u32 %s26, 1
        %s381 = scalar_lea.sflag [#allocation9], %s380
        %s382 = sand.u32 %s125, 1
        %s383 = smul.addr %s382, 8
        %s384 = scalar_lea.vmem [#allocation8], %s383
        %s385 = sand.u32 %s26, 1
        %s386 = scalar_lea.sflag [#allocation9], %s385
        %s387 = sand.u32 %s153, 1
        %s388 = smul.addr %s387, 8
        %s389 = scalar_lea.vmem [#allocation10], %s388
        // Predicated region
        $region37: #{tpu_custom_call.1} parent=27 // pred_check
          %p390 = pneg %p107
        $region38: #{tpu_custom_call.1} parent=27 // pred_check_branch
          %392 = sbr.rel (%p390) target = $region40
        $region39: #{tpu_custom_call.1} parent=27 // pred_region
          %s393 = smul.u32 2, %s31
          %s395 = ssub.s32 128, 128
          %396 = vsyncadd %s376, %s395
          %s397 = smul.addr %s30, 2
          %s398 = sadd.s32 %s393, %s397
          %s399 = smul.addr %s398, 64
          %s400 = scalar_lea.hbm %s2, %s399
          %s401 = sshll.u32 %s379, 4
          %s402 = int_to_ptr.vmem [resolvable:$true] %s401
          %407 = dma.vmem_to_hbm [thread:$0]  %s402, 128, %s400, %s376, 64, 64, 4
        $region40: #{tpu_custom_call.1} parent=27 // pred_fallthru
          _
        // Predicated region
        $region41: #{tpu_custom_call.1} parent=27 // pred_check
          %p408 = pneg %p135
        $region42: #{tpu_custom_call.1} parent=27 // pred_check_branch
          %410 = sbr.rel (%p408) target = $region44
        $region43: #{tpu_custom_call.1} parent=27 // pred_region
          %s411 = smul.u32 2, %s31
          %s413 = ssub.s32 128, 128
          %414 = vsyncadd %s381, %s413
          %s415 = smul.addr %s30, 2
          %s416 = sadd.s32 %s411, %s415
          %s417 = smul.addr %s416, 64
          %s418 = scalar_lea.hbm %s3, %s417
          %s419 = sshll.u32 %s384, 4
          %s420 = int_to_ptr.vmem [resolvable:$true] %s419
          %425 = dma.vmem_to_hbm [thread:$0]  %s420, 128, %s418, %s381, 64, 64, 4
        $region44: #{tpu_custom_call.1} parent=27 // pred_fallthru
          _
        // Predicated region
        $region45: #{tpu_custom_call.1} parent=27 // pred_check
          %p426 = pneg %p163
        $region46: #{tpu_custom_call.1} parent=27 // pred_check_branch
          %428 = sbr.rel (%p426) target = $region48
        $region47: #{tpu_custom_call.1} parent=27 // pred_region
          %s429 = smul.u32 2, %s31
          %s431 = ssub.s32 128, 128
          %432 = vsyncadd %s386, %s431
          %s433 = smul.addr %s30, 2
          %s434 = sadd.s32 %s429, %s433
          %s435 = smul.addr %s434, 64
          %s436 = scalar_lea.hbm %s4, %s435
          %s437 = sshll.u32 %s389, 4
          %s438 = int_to_ptr.vmem [resolvable:$true] %s437
          %443 = dma.vmem_to_hbm [thread:$0]  %s438, 128, %s436, %s386, 64, 64, 4
        $region48: #{tpu_custom_call.1} parent=27 // pred_fallthru
          _
      $region28: #{tpu_custom_call.1} parent=5 // pred_fallthru
        _
      %p444 = scmp.le.s32.totalorder 2, %s21
      // Predicated region
      $region49: #{tpu_custom_call.1} parent=5 // pred_check
        %p445 = pneg %p444
      $region50: #{tpu_custom_call.1} parent=5 // pred_check_branch
        %447 = sbr.rel (%p445) target = $region52
      $region51: #{tpu_custom_call.1} parent=5 // pred_region
        %s448 = ssub.s32 %s21, 2
        // Predicated region
        $region53: #{tpu_custom_call.1} parent=51 // pred_check
          %p449 = pneg %p113
        $region54: #{tpu_custom_call.1} parent=51 // pred_check_branch
          %451 = sbr.rel (%p449) target = $region56
        $region55: #{tpu_custom_call.1} parent=51 // pred_region
          %s452 = sand.u32 %s98, 1
          %s453 = scalar_lea.sflag [#allocation4], %s452
          %s454 = sand.u32 %s98, 1
          %s455 = smul.addr %s454, 8
          %s456 = scalar_lea.vmem [#allocation7], %s455
          %457 = dma.done %s453, 128
        $region56: #{tpu_custom_call.1} parent=51 // pred_fallthru
          _
        // Predicated region
        $region57: #{tpu_custom_call.1} parent=51 // pred_check
          %p458 = pneg %p141
        $region58: #{tpu_custom_call.1} parent=51 // pred_check_branch
          %460 = sbr.rel (%p458) target = $region60
        $region59: #{tpu_custom_call.1} parent=51 // pred_region
          %s461 = sand.u32 %s27, 1
          %s462 = scalar_lea.sflag [#allocation9], %s461
          %s463 = sand.u32 %s126, 1
          %s464 = smul.addr %s463, 8
          %s465 = scalar_lea.vmem [#allocation8], %s464
          %466 = dma.done %s462, 128
        $region60: #{tpu_custom_call.1} parent=51 // pred_fallthru
          _
        // Predicated region
        $region61: #{tpu_custom_call.1} parent=51 // pred_check
          %p467 = pneg %p169
        $region62: #{tpu_custom_call.1} parent=51 // pred_check_branch
          %469 = sbr.rel (%p467) target = $region64
        $region63: #{tpu_custom_call.1} parent=51 // pred_region
          %s470 = sand.u32 %s27, 1
          %s471 = scalar_lea.sflag [#allocation9], %s470
          %s472 = sand.u32 %s154, 1
          %s473 = smul.addr %s472, 8
          %s474 = scalar_lea.vmem [#allocation10], %s473
          %475 = dma.done %s471, 128
        $region64: #{tpu_custom_call.1} parent=51 // pred_fallthru
          _
      $region52: #{tpu_custom_call.1} parent=5 // pred_fallthru
        _
    $region6: #{tpu_custom_call.1} parent=1 // loop_footer
      %s25 = sadd.s32 1, %s21
    $region7: #{tpu_custom_call.1} parent=1 // loop_footer_branch
      %20 = sbr.rel target = $region3
    $region8: #{tpu_custom_call.1} parent=1 // loop_exit
      _
    %476 = vsyncpa [#allocation3], 1
    %s477 = scalar_lea.sflag [#allocation3], 1
    %478 = vsyncpa %s477, 1
    %479 = vsyncpa [#allocation6], 1
    %480 = vsyncpa [#allocation4], 1
    %s481 = scalar_lea.sflag [#allocation4], 1
    %482 = vsyncpa %s481, 1
    %483 = vsyncpa [#allocation9], 1
    %s484 = scalar_lea.sflag [#allocation9], 1
    %485 = vsyncpa %s484, 1

</llo_original>
